<compile_context>
chip_gen: v6e
topology: v6e:2x2x1
jax: 0.10.0
libtpu: 0.0.40
codegen_flags: <defaults>
</compile_context>

<pallas_src>
import jax
import jax.numpy as jnp
from jax.experimental import pallas as pl
from jax.experimental.pallas import tpu as pltpu


def _round_up(x: int, m: int) -> int:
    return ((x + m - 1) // m) * m


def _choose_tn(NP: int, B: int) -> int:
    """Largest multiple-of-128 divisor of NP, capped at 2048.

    If that leaves fewer than 2 grid steps (single batch, single tile), split the
    position axis further so both v7x TensorCores get work.
    """
    tn = 128
    for cand in range(min(NP, 2048), 127, -128):
        if NP % cand == 0:
            tn = cand
            break
    if B * (NP // tn) < 2:
        start = (tn // 2) // 128 * 128
        for cand in range(start, 127, -128):
            if NP % cand == 0:
                tn = cand
                break
    return tn


def _additive_attn_kernel(k_ref, qp_ref, m_ref, w1_ref, v_ref, bv_ref, o_ref):
    # k_ref  : (1, D, TN)  transposed key tile, compute dtype (f32 or bf16)
    # qp_ref : (1, D, 1)   per-batch query projection (W2 q + b1 + b2), f32
    # m_ref  : (1, 1, TN)  int32 mask tile (1 = valid)
    # w1_ref : (D, D)      W1 as stored (out = W1 @ x), compute dtype, resident
    # v_ref  : (D, 1)      scoring vector, f32, resident
    # bv_ref : (1, 1)      scoring bias, SMEM scalar
    # o_ref  : (1, 1, TN)  unnormalized scores (-inf at masked positions)
    key_out = jnp.dot(w1_ref[...], k_ref[0],
                      preferred_element_type=jnp.float32)        # (D, TN) f32 acc
    h = jnp.tanh(key_out + qp_ref[0])                            # (D, TN) f32
    ui = jnp.sum(h * v_ref[...], axis=0, keepdims=True) + bv_ref[0, 0]   # (1, TN)
    o_ref[0] = jnp.where(m_ref[0] != 0, ui, -jnp.inf)


def additive_attention(query, key, mask, params, *, compute_dtype=jnp.float32):
    """query (B, D), key (B, N, D), mask (B, N) -> scores (B, N) float32.

    `compute_dtype` controls the key/W1 DMA + MXU dtype (float32 for exact parity,
    bfloat16 to halve key HBM traffic).  The tanh / scoring path is always f32.
    """
    query = query.astype(jnp.float32)
    key = key.astype(jnp.float32)
    B, N, D = key.shape

    # Hoisted query projection: one (B,D)@(D,D) matmul, both biases folded in.
    q_proj = query @ params["W2"].T.astype(jnp.float32) + (
        params["b1"].astype(jnp.float32) + params["b2"].astype(jnp.float32))

    NP = _round_up(N, 128)          # pad positions to the 128-lane granule only
    TN = _choose_tn(NP, B)

    # Lane-dense transposed key (B, D, NP): single materialization, tail pad fused.
    key_t = jnp.swapaxes(key, 1, 2).astype(compute_dtype)         # (B, D, N)
    mask_p = mask.astype(jnp.int32).reshape(B, 1, N)
    if NP != N:
        key_t = jnp.pad(key_t, ((0, 0), (0, 0), (0, NP - N)))
        mask_p = jnp.pad(mask_p, ((0, 0), (0, 0), (0, NP - N)))

    qp = q_proj.reshape(B, D, 1)                                  # f32
    w1 = params["W1"].astype(compute_dtype)                       # (D, D)
    v_col = params["v"].reshape(D, 1).astype(jnp.float32)         # (D, 1)
    bv = params["bv"].reshape(1, 1).astype(jnp.float32)           # SMEM scalar

    grid = (B, NP // TN)

    out = pl.pallas_call(
        _additive_attn_kernel,
        out_shape=jax.ShapeDtypeStruct((B, 1, NP), jnp.float32),
        grid_spec=pltpu.PrefetchScalarGridSpec(
            num_scalar_prefetch=0,
            grid=grid,
            in_specs=[
                pl.BlockSpec((1, D, TN), lambda b, n: (b, 0, n)),      # key tile
                pl.BlockSpec((1, D, 1), lambda b, n: (b, 0, 0)),       # q_proj row
                pl.BlockSpec((1, 1, TN), lambda b, n: (b, 0, n)),      # mask tile
                pl.BlockSpec((D, D), lambda b, n: (0, 0)),             # W1 (resident)
                pl.BlockSpec((D, 1), lambda b, n: (0, 0)),             # v  (resident)
                pl.BlockSpec(memory_space=pltpu.MemorySpace.SMEM),     # bv (scalar)
            ],
            out_specs=pl.BlockSpec((1, 1, TN), lambda b, n: (b, 0, n)),
        ),
        compiler_params=pltpu.CompilerParams(
            dimension_semantics=("parallel", "parallel")),
    )(key_t, qp, mask_p, w1, v_col, bv)

    return out.reshape(B, NP)[:, :N]


def _reference(query, key, mask, params):
    key_out = key @ params["W1"].T + params["b1"]
    query_out = (query @ params["W2"].T + params["b2"])[:, None, :]
    ui = jnp.tanh(key_out + query_out) @ params["v"].reshape(-1, 1) + params["bv"]
    ui = ui[..., 0]
    return jnp.where(mask != 0, ui, -jnp.inf)


def _run_case(params, query, key, mask, *, compute_dtype=jnp.float32,
              atol=1e-5, rtol=1e-5):
    out = jax.block_until_ready(
        additive_attention(query, key, mask, params, compute_dtype=compute_dtype))
    ref = _reference(query, key, mask, params)
    finite = mask != 0
    assert out.shape == mask.shape
    assert bool(jnp.all(jnp.isneginf(out) == ~finite))
    assert bool(jnp.allclose(jnp.where(finite, out, 0.0),
                             jnp.where(finite, ref, 0.0),
                             atol=atol, rtol=rtol))


if __name__ == "__main__":
    D = 32  # input_dim

    root = jax.random.PRNGKey(0)
    ks = jax.random.split(root, 14)

    # Deterministic parameter init (shapes follow nn.Linear in __init__).
    bound = 1.0 / jnp.sqrt(D)
    params = {
        "W1": jax.random.uniform(ks[0], (D, D), jnp.float32, -bound, bound),
        "b1": jax.random.uniform(ks[1], (D,), jnp.float32, -bound, bound),
        "W2": jax.random.uniform(ks[2], (D, D), jnp.float32, -bound, bound),
        "b2": jax.random.uniform(ks[3], (D,), jnp.float32, -bound, bound),
        "v":  jax.random.uniform(ks[4], (1, D), jnp.float32, -bound, bound),
        "bv": jax.random.uniform(ks[5], (1,), jnp.float32, -bound, bound),
    }

    # Case 1: small shapes from the spec (B=2, N=8), exact f32 path.
    B1, N1 = 2, 8
    query1 = jax.random.normal(ks[6], (B1, D), jnp.float32)
    key1 = jax.random.normal(ks[7], (B1, N1, D), jnp.float32)
    mask1 = jnp.ones((B1, N1), jnp.int32).at[1, N1 - 3:].set(0)
    _run_case(params, query1, key1, mask1)

    # Case 2: odd batch + non-multiple-of-128 sequence (ragged 128-pad path), f32.
    B2, N2 = 3, 200
    query2 = jax.random.normal(ks[8], (B2, D), jnp.float32)
    key2 = jax.random.normal(ks[9], (B2, N2, D), jnp.float32)
    mask2 = jnp.ones((B2, N2), jnp.int32).at[0, N2 - 50:].set(0).at[2, :5].set(0)
    _run_case(params, query2, key2, mask2)

    # Case 3: single batch (exercises the >=2-grid-step tile split for v7x) with the
    # bf16 key/matmul path; tolerance relaxed accordingly.
    B3, N3 = 1, 300
    query3 = jax.random.normal(ks[10], (B3, D), jnp.float32)
    key3 = jax.random.normal(ks[11], (B3, N3, D), jnp.float32)
    mask3 = jnp.ones((B3, N3), jnp.int32).at[0, N3 - 37:].set(0)
    _run_case(params, query3, key3, mask3,
              compute_dtype=jnp.bfloat16, atol=5e-2, rtol=5e-2)

    # TODO(synk): softmax=True branch of the reference calls torch.softmax with no
    # dim argument and is not exercised; not implemented here.
    print("KERNEL_OK")
</pallas_src>

<mosaic_0001>
module attributes {stable_mosaic.version = 11 : i64} {
  func.func @_additive_attn_kernel(%arg0: i32, %arg1: i32, %arg2: memref<1x32x128xf32, #tpu.memory_space<vmem>>, %arg3: memref<1x32x1xf32, #tpu.memory_space<vmem>>, %arg4: memref<1x1x128xi32, #tpu.memory_space<vmem>>, %arg5: memref<32x32xf32, #tpu.memory_space<vmem>>, %arg6: memref<32x1xf32, #tpu.memory_space<vmem>>, %arg7: memref<1x1xf32, #tpu.memory_space<smem>>, %arg8: memref<1x1x128xf32, #tpu.memory_space<vmem>>) attributes {dimension_semantics = [#tpu.dimension_semantics<parallel>, #tpu.dimension_semantics<parallel>], iteration_bounds = array<i64: 2, 1>, scalar_prefetch = 0 : i64, scratch_operands = 0 : i64, tpu.core_type = #tpu.core_type<tc>, window_params = [{transform_indices = @transform_0, window_bounds = array<i64: 1, 32, 128>}, {transform_indices = @transform_1, window_bounds = array<i64: 1, 32, 1>}, {transform_indices = @transform_2, window_bounds = array<i64: 1, 1, 128>}, {pipeline_mode = #tpu.pipeline_mode<synchronous>, transform_indices = @transform_3, window_bounds = array<i64: 32, 32>}, {pipeline_mode = #tpu.pipeline_mode<synchronous>, transform_indices = @transform_4, window_bounds = array<i64: 32, 1>}, {transform_indices = @transform_5, window_bounds = array<i64: 1, 1>}, {transform_indices = @transform_6, window_bounds = array<i64: 1, 1, 128>}]} {
    %c0 = arith.constant 0 : index
    %c0_0 = arith.constant 0 : index
    %0 = vector.load %arg5[%c0, %c0_0] : memref<32x32xf32, #tpu.memory_space<vmem>>, vector<32x32xf32>
    %c0_1 = arith.constant 0 : index
    %c0_2 = arith.constant 0 : index
    %c0_3 = arith.constant 0 : index
    %1 = vector.load %arg2[%c0_1, %c0_2, %c0_3] : memref<1x32x128xf32, #tpu.memory_space<vmem>>, vector<1x32x128xf32>
    %2 = vector.shape_cast %1 : vector<1x32x128xf32> to vector<32x128xf32>
    %cst = arith.constant dense<0.000000e+00> : vector<32x128xf32>
    %3 = tpu.matmul %0, %2, %cst {dimension_numbers = #tpu.dot_dimension_numbers<[1], [0], [0], [1], [0, 0, 1, 1], [], []>} : vector<32x32xf32>, vector<32x128xf32>, vector<32x128xf32> -> vector<32x128xf32>
    %c0_4 = arith.constant 0 : index
    %c0_5 = arith.constant 0 : index
    %c0_6 = arith.constant 0 : index
    %4 = vector.load %arg3[%c0_4, %c0_5, %c0_6] : memref<1x32x1xf32, #tpu.memory_space<vmem>>, vector<1x32x1xf32>
    %5 = vector.shape_cast %4 : vector<1x32x1xf32> to vector<32x1xf32>
    %6 = vector.broadcast %5 : vector<32x1xf32> to vector<32x128xf32>
    %7 = arith.addf %3, %6 : vector<32x128xf32>
    %8 = math.tanh %7 : vector<32x128xf32>
    %c0_7 = arith.constant 0 : index
    %c0_8 = arith.constant 0 : index
    %9 = vector.load %arg6[%c0_7, %c0_8] : memref<32x1xf32, #tpu.memory_space<vmem>>, vector<32x1xf32>
    %10 = vector.broadcast %9 : vector<32x1xf32> to vector<32x128xf32>
    %11 = arith.mulf %8, %10 : vector<32x128xf32>
    %cst_9 = arith.constant dense<0.000000e+00> : vector<128xf32>
    %12 = vector.multi_reduction <add>, %11, %cst_9 [0] : vector<32x128xf32> to vector<128xf32>
    %13 = vector.shape_cast %12 : vector<128xf32> to vector<1x128xf32>
    %c0_10 = arith.constant 0 : index
    %c0_11 = arith.constant 0 : index
    %14 = memref.load %arg7[%c0_10, %c0_11] : memref<1x1xf32, #tpu.memory_space<smem>>
    %15 = vector.broadcast %14 : f32 to vector<1x128xf32>
    %16 = arith.addf %13, %15 : vector<1x128xf32>
    %c0_12 = arith.constant 0 : index
    %c0_13 = arith.constant 0 : index
    %c0_14 = arith.constant 0 : index
    %17 = vector.load %arg4[%c0_12, %c0_13, %c0_14] : memref<1x1x128xi32, #tpu.memory_space<vmem>>, vector<1x1x128xi32>
    %18 = vector.shape_cast %17 : vector<1x1x128xi32> to vector<1x128xi32>
    %c0_i32 = arith.constant 0 : i32
    %19 = vector.broadcast %c0_i32 : i32 to vector<1x128xi32>
    %20 = arith.cmpi ne, %18, %19 : vector<1x128xi32>
    %cst_15 = arith.constant 0xFF800000 : f32
    %21 = vector.broadcast %cst_15 : f32 to vector<1x128xf32>
    %22 = arith.select %20, %16, %21 : vector<1x128xi1>, vector<1x128xf32>
    %c0_16 = arith.constant 0 : index
    %c0_17 = arith.constant 0 : index
    %c0_18 = arith.constant 0 : index
    %23 = vector.load %arg8[%c0_16, %c0_17, %c0_18] : memref<1x1x128xf32, #tpu.memory_space<vmem>>, vector<1x1x128xf32>
    %24 = vector.shape_cast %23 : vector<1x1x128xf32> to vector<1x128xf32>
    %25 = vector.shape_cast %22 : vector<1x128xf32> to vector<1x1x128xf32>
    tpu.vector_store %arg8[%c0_16, %c0_17, %c0_18], %25 {strides = array<i32>} : memref<1x1x128xf32, #tpu.memory_space<vmem>>, vector<1x1x128xf32>,
    return
  }
  func.func @transform_0(%arg0: i32, %arg1: i32) -> (i32, i32, i32) {
    %c0_i32 = arith.constant 0 : i32
    %c0_i32_0 = arith.constant 0 : i32
    return %arg0, %c0_i32, %arg1 : i32, i32, i32
  }
  func.func @transform_1(%arg0: i32, %arg1: i32) -> (i32, i32, i32) {
    %c0_i32 = arith.constant 0 : i32
    %c0_i32_0 = arith.constant 0 : i32
    %c0_i32_1 = arith.constant 0 : i32
    return %arg0, %c0_i32, %c0_i32_0 : i32, i32, i32
  }
  func.func @transform_2(%arg0: i32, %arg1: i32) -> (i32, i32, i32) {
    %c0_i32 = arith.constant 0 : i32
    %c0_i32_0 = arith.constant 0 : i32
    return %arg0, %c0_i32, %arg1 : i32, i32, i32
  }
  func.func @transform_3(%arg0: i32, %arg1: i32) -> (i32, i32) {
    %c0_i32 = arith.constant 0 : i32
    %c0_i32_0 = arith.constant 0 : i32
    %c0_i32_1 = arith.constant 0 : i32
    return %c0_i32, %c0_i32_0 : i32, i32
  }
  func.func @transform_4(%arg0: i32, %arg1: i32) -> (i32, i32) {
    %c0_i32 = arith.constant 0 : i32
    %c0_i32_0 = arith.constant 0 : i32
    %c0_i32_1 = arith.constant 0 : i32
    return %c0_i32, %c0_i32_0 : i32, i32
  }
  func.func @transform_5(%arg0: i32, %arg1: i32) -> (i32, i32) {
    %c0_i32 = arith.constant 0 : i32
    %c0_i32_0 = arith.constant 0 : i32
    %c0_i32_1 = arith.constant 0 : i32
    return %c0_i32, %c0_i32_0 : i32, i32
  }
  func.func @transform_6(%arg0: i32, %arg1: i32) -> (i32, i32, i32) {
    %c0_i32 = arith.constant 0 : i32
    %c0_i32_0 = arith.constant 0 : i32
    return %arg0, %c0_i32, %arg1 : i32, i32, i32
  }
}

</mosaic_0001>

<llo_original>
// kernel: tpu_custom_call.1
$region0: #{tpu_custom_call.1}
  #allocation0 [shape = 'u32[]', space=smem, size = 0x4, offset = 0x4, fixed_abs, tag = 'smem constant byte address 0x4 - core index']
  #allocation1 [shape = 'u32[144,128]{1,0:T(1,128)}', space=vmem, size = 0x12000, scoped, tag = 'internal scratch']
  #allocation2 [shape = 'f32[1,1]{1,0:T(1,128)S(6)}', space=smem, size = 0x200, scoped, tag = 'scoped memory for tpu_custom_call.1']
  %s0 = inlined_call_operand.vmem [shape: f32[2,32,128], index: 0, kind: input, shape index: {}]
  %s1 = inlined_call_operand.vmem [shape: f32[2,32,1], index: 1, kind: input, shape index: {}]
  %s2 = inlined_call_operand.vmem [shape: s32[2,1,128], index: 2, kind: input, shape index: {}]
  %s3 = inlined_call_operand.vmem [shape: f32[32,32], index: 3, kind: input, shape index: {}]
  %s4 = inlined_call_operand.vmem [shape: f32[32,1], index: 4, kind: input, shape index: {}]
  %s5 = inlined_call_operand.<no memory space> [shape: f32[1,1], index: 5, kind: input, shape index: {}]
  %s6 = inlined_call_operand.hbm [shape: f32[2,1,128], index: 6, kind: output, shape index: {}]
  %s7 = sld [smem:[#allocation0]]
  $region57: #{tpu_custom_call.1} parent=0
    _
  %s9 = ssub.s32 1, %s7
  %s10 = scalar_select 0, %s9, %s7
  %11 = sst [smem:[#allocation2]] %s5
  $region1: #{tpu_custom_call.1} parent=0
    #allocation3 [shape = 'u8[1024]{0}', space=vmem, size = 0x400, scoped, tag = 'output window, operand 0']
    #allocation4 [shape = 's32[2]{0}', space=sflag, size = 0x8, scoped, tag = 'scoped memory for tpu_custom_call.1']
    %12 = vsyncpa [#allocation4], 0
    %s13 = scalar_lea.sflag [#allocation4], 1
    %14 = vsyncpa %s13, 0
    loop: start=0, step=1, limit=4
    $region2: #{tpu_custom_call.1} parent=1 // loop_pre_header
      _
    $region3: #{tpu_custom_call.1} parent=1 // loop_header
      %s16 = sphi 0, %s20
      %p17 = scmp.ge.s32.totalorder %s16, 4
      %s23 = sphi 0, %s35
      %s24 = sphi 0, %s31
      %s25 = sphi 0, %s23
      %s26 = sphi 0, %s24
      %s27 = sphi 0, %s25
      %s28 = sphi 0, %s26
      %s40 = sphi 0, %s42
      %s43 = sphi 0, %s40
      %s44 = sphi 0, %s43
      %s60 = sphi 0, %s44
      %s66 = sphi 0, %s68
      %s69 = sphi 0, %s66
      %s70 = sphi 0, %s69
      %s86 = sphi 0, %s70
      %s94 = sphi 0, %s96
      %s97 = sphi 0, %s94
      %s98 = sphi 0, %s97
      %s114 = sphi 0, %s98
      %s118 = sphi 0, %s118
      %s120 = sphi 0, %s118
      %s121 = sphi 0, %s120
      %s135 = sphi 0, %s121
      %s139 = sphi 0, %s139
      %s141 = sphi 0, %s139
      %s142 = sphi 0, %s141
      %s156 = sphi 0, %s142
      %s160 = sphi 0, %s160
      %s162 = sphi 0, %s160
      %s163 = sphi 0, %s162
      %s177 = sphi 0, %s163
      %s185 = sphi 0, %s187
      %s188 = sphi 0, %s185
      %s189 = sphi 0, %s188
      %s205 = sphi 0, %s189
    $region4: #{tpu_custom_call.1} parent=1 // loop_header_branch
      %19 = sbr.rel (%p17) target = $region8
    $region5: #{tpu_custom_call.1} parent=1 // loop_body
      %s21 = ssub.s32 %s16, 1
      %s22 = ssub.s32 %s16, 2
      %s29 = sadd.s32 1, %s24
      %p30 = scmp.ge.s32.totalorder %s29, 1
      %s31 = scalar_select %p30, 0, %s29
      %s32 = sadd.s32 1, %s23
      %s33 = scalar_select %p30, %s32, %s23
      %p34 = scmp.ge.s32.totalorder %s33, 2
      %s35 = scalar_select %p34, 0, %s33
      %s36 = ssub.s32 %s23, %s35
      %s37 = ssub.s32 %s24, %s31
      %s38 = sor.u32 %s36, %s37
      %p39 = scmp.eq.s32.totalorder %s38, 0
      %s41 = sadd.s32 %s40, 1
      %s42 = scalar_select %p39, %s40, %s41
      %p45 = pneg %p39
      %p46 = scmp.eq.s32.totalorder %s16, 1
      %p47 = por %p45, %p46
      %p48 = scmp.ne.s32.totalorder %s40, %s43
      %p49 = scmp.eq.s32.totalorder %s16, 0
      %p50 = por %p48, %p49
      %p51 = scmp.ne.s32.totalorder %s40, %s43
      %p52 = scmp.eq.s32.totalorder %s21, 1
      %p53 = por %p51, %p52
      %p54 = scmp.ne.s32.totalorder %s43, %s44
      %p55 = scmp.eq.s32.totalorder %s21, 0
      %p56 = por %p54, %p55
      %p57 = scmp.ne.s32.totalorder %s43, %s44
      %p58 = scmp.eq.s32.totalorder %s22, 1
      %p59 = por %p57, %p58
      %p61 = scmp.ne.s32.totalorder %s44, %s60
      %p62 = scmp.eq.s32.totalorder %s22, 0
      %p63 = por %p61, %p62
      %s64 = ssub.s32 %s23, %s35
      %p65 = scmp.eq.s32.totalorder %s64, 0
      %s67 = sadd.s32 %s66, 1
      %s68 = scalar_select %p65, %s66, %s67
      %p71 = pneg %p65
      %p72 = scmp.eq.s32.totalorder %s16, 1
      %p73 = por %p71, %p72
      %p74 = scmp.ne.s32.totalorder %s66, %s69
      %p75 = scmp.eq.s32.totalorder %s16, 0
      %p76 = por %p74, %p75
      %p77 = scmp.ne.s32.totalorder %s66, %s69
      %p78 = scmp.eq.s32.totalorder %s21, 1
      %p79 = por %p77, %p78
      %p80 = scmp.ne.s32.totalorder %s69, %s70
      %p81 = scmp.eq.s32.totalorder %s21, 0
      %p82 = por %p80, %p81
      %p83 = scmp.ne.s32.totalorder %s69, %s70
      %p84 = scmp.eq.s32.totalorder %s22, 1
      %p85 = por %p83, %p84
      %p87 = scmp.ne.s32.totalorder %s70, %s86
      %p88 = scmp.eq.s32.totalorder %s22, 0
      %p89 = por %p87, %p88
      %s90 = ssub.s32 %s23, %s35
      %s91 = ssub.s32 %s24, %s31
      %s92 = sor.u32 %s90, %s91
      %p93 = scmp.eq.s32.totalorder %s92, 0
      %s95 = sadd.s32 %s94, 1
      %s96 = scalar_select %p93, %s94, %s95
      %p99 = pneg %p93
      %p100 = scmp.eq.s32.totalorder %s16, 1
      %p101 = por %p99, %p100
      %p102 = scmp.ne.s32.totalorder %s94, %s97
      %p103 = scmp.eq.s32.totalorder %s16, 0
      %p104 = por %p102, %p103
      %p105 = scmp.ne.s32.totalorder %s94, %s97
      %p106 = scmp.eq.s32.totalorder %s21, 1
      %p107 = por %p105, %p106
      %p108 = scmp.ne.s32.totalorder %s97, %s98
      %p109 = scmp.eq.s32.totalorder %s21, 0
      %p110 = por %p108, %p109
      %p111 = scmp.ne.s32.totalorder %s97, %s98
      %p112 = scmp.eq.s32.totalorder %s22, 1
      %p113 = por %p111, %p112
      %p115 = scmp.ne.s32.totalorder %s98, %s114
      %p116 = scmp.eq.s32.totalorder %s22, 0
      %p117 = por %p115, %p116
      %s119 = sadd.s32 %s118, 1
      %p122 = scmp.eq.s32.totalorder %s16, 1
      %p123 = scmp.ne.s32.totalorder %s118, %s120
      %p124 = scmp.eq.s32.totalorder %s16, 0
      %p125 = por %p123, %p124
      %p126 = scmp.ne.s32.totalorder %s118, %s120
      %p127 = scmp.eq.s32.totalorder %s21, 1
      %p128 = por %p126, %p127
      %p129 = scmp.ne.s32.totalorder %s120, %s121
      %p130 = scmp.eq.s32.totalorder %s21, 0
      %p131 = por %p129, %p130
      %p132 = scmp.ne.s32.totalorder %s120, %s121
      %p133 = scmp.eq.s32.totalorder %s22, 1
      %p134 = por %p132, %p133
      %p136 = scmp.ne.s32.totalorder %s121, %s135
      %p137 = scmp.eq.s32.totalorder %s22, 0
      %p138 = por %p136, %p137
      %s140 = sadd.s32 %s139, 1
      %p143 = scmp.eq.s32.totalorder %s16, 1
      %p144 = scmp.ne.s32.totalorder %s139, %s141
      %p145 = scmp.eq.s32.totalorder %s16, 0
      %p146 = por %p144, %p145
      %p147 = scmp.ne.s32.totalorder %s139, %s141
      %p148 = scmp.eq.s32.totalorder %s21, 1
      %p149 = por %p147, %p148
      %p150 = scmp.ne.s32.totalorder %s141, %s142
      %p151 = scmp.eq.s32.totalorder %s21, 0
      %p152 = por %p150, %p151
      %p153 = scmp.ne.s32.totalorder %s141, %s142
      %p154 = scmp.eq.s32.totalorder %s22, 1
      %p155 = por %p153, %p154
      %p157 = scmp.ne.s32.totalorder %s142, %s156
      %p158 = scmp.eq.s32.totalorder %s22, 0
      %p159 = por %p157, %p158
      %s161 = sadd.s32 %s160, 1
      %p164 = scmp.eq.s32.totalorder %s16, 1
      %p165 = scmp.ne.s32.totalorder %s160, %s162
      %p166 = scmp.eq.s32.totalorder %s16, 0
      %p167 = por %p165, %p166
      %p168 = scmp.ne.s32.totalorder %s160, %s162
      %p169 = scmp.eq.s32.totalorder %s21, 1
      %p170 = por %p168, %p169
      %p171 = scmp.ne.s32.totalorder %s162, %s163
      %p172 = scmp.eq.s32.totalorder %s21, 0
      %p173 = por %p171, %p172
      %p174 = scmp.ne.s32.totalorder %s162, %s163
      %p175 = scmp.eq.s32.totalorder %s22, 1
      %p176 = por %p174, %p175
      %p178 = scmp.ne.s32.totalorder %s163, %s177
      %p179 = scmp.eq.s32.totalorder %s22, 0
      %p180 = por %p178, %p179
      %s181 = ssub.s32 %s23, %s35
      %s182 = ssub.s32 %s24, %s31
      %s183 = sor.u32 %s181, %s182
      %p184 = scmp.eq.s32.totalorder %s183, 0
      %s186 = sadd.s32 %s185, 1
      %s187 = scalar_select %p184, %s185, %s186
      %p190 = pneg %p184
      %p191 = scmp.eq.s32.totalorder %s16, 1
      %p192 = por %p190, %p191
      %p193 = scmp.ne.s32.totalorder %s185, %s188
      %p194 = scmp.eq.s32.totalorder %s16, 0
      %p195 = por %p193, %p194
      %p196 = scmp.ne.s32.totalorder %s185, %s188
      %p197 = scmp.eq.s32.totalorder %s21, 1
      %p198 = por %p196, %p197
      %p199 = scmp.ne.s32.totalorder %s188, %s189
      %p200 = scmp.eq.s32.totalorder %s21, 0
      %p201 = por %p199, %p200
      %p202 = scmp.ne.s32.totalorder %s188, %s189
      %p203 = scmp.eq.s32.totalorder %s22, 1
      %p204 = por %p202, %p203
      %p206 = scmp.ne.s32.totalorder %s189, %s205
      %p207 = scmp.eq.s32.totalorder %s22, 0
      %p208 = por %p206, %p207
      %p209 = scmp.le.s32.totalorder 1, %s16
      %p210 = scmp.lt.s32.totalorder %s16, 3
      %p211 = pnand %p209, %p210
      %p212 = pneg %p211
      // Predicated region
      $region9: #{tpu_custom_call.1} parent=5 // pred_check
        _
      $region10: #{tpu_custom_call.1} parent=5 // pred_check_branch
        %214 = sbr.rel (%p211) target = $region12
      $region11: #{tpu_custom_call.1} parent=5 // pred_region
        %s215 = ssub.s32 %s16, 1
        // Predicated region
        $region13: #{tpu_custom_call.1} parent=11 // pred_check
          %p216 = pneg %p131
        $region14: #{tpu_custom_call.1} parent=11 // pred_check_branch
          %218 = sbr.rel (%p216) target = $region16
        $region15: #{tpu_custom_call.1} parent=11 // pred_region
          _
        $region16: #{tpu_custom_call.1} parent=11 // pred_fallthru
          _
        // Predicated region
        $region17: #{tpu_custom_call.1} parent=11 // pred_check
          %p219 = pneg %p152
        $region18: #{tpu_custom_call.1} parent=11 // pred_check_branch
          %221 = sbr.rel (%p219) target = $region20
        $region19: #{tpu_custom_call.1} parent=11 // pred_region
          _
        $region20: #{tpu_custom_call.1} parent=11 // pred_fallthru
          _
        // Predicated region
        $region21: #{tpu_custom_call.1} parent=11 // pred_check
          %p222 = pneg %p173
        $region22: #{tpu_custom_call.1} parent=11 // pred_check_branch
          %224 = sbr.rel (%p222) target = $region24
        $region23: #{tpu_custom_call.1} parent=11 // pred_region
          _
        $region24: #{tpu_custom_call.1} parent=11 // pred_fallthru
          _
      $region12: #{tpu_custom_call.1} parent=5 // pred_fallthru
        _
      %p225 = scmp.lt.s32.totalorder %s16, 2
      // Predicated region
      $region25: #{tpu_custom_call.1} parent=5 // pred_check
        %p226 = pneg %p225
      $region26: #{tpu_custom_call.1} parent=5 // pred_check_branch
        %228 = sbr.rel (%p226) target = $region28
      $region27: #{tpu_custom_call.1} parent=5 // pred_region
        // Predicated region
        $region29: #{tpu_custom_call.1} parent=27 // pred_check
          %p229 = pneg %p50
        $region30: #{tpu_custom_call.1} parent=27 // pred_check_branch
          %231 = sbr.rel (%p229) target = $region32
        $region31: #{tpu_custom_call.1} parent=27 // pred_region
          %p232 = scmp.lt.s32.totalorder %s23, 1
          %s233 = scalar_select %p232, %s23, 1
          %p234 = scmp.lt.s32.totalorder %s24, 0
          %s235 = scalar_select %p234, %s24, 0
          %s236 = smul.addr %s233, 4
          %s237 = sadd.s32 %s235, %s236
          %s238 = smul.addr %s237, 8
          %s239 = scalar_lea.vmem %s0, %s238
        $region32: #{tpu_custom_call.1} parent=27 // pred_fallthru
          _
        // Predicated region
        $region33: #{tpu_custom_call.1} parent=27 // pred_check
          %p240 = pneg %p76
        $region34: #{tpu_custom_call.1} parent=27 // pred_check_branch
          %242 = sbr.rel (%p240) target = $region36
        $region35: #{tpu_custom_call.1} parent=27 // pred_region
          %p243 = scmp.lt.s32.totalorder %s23, 1
          %s244 = scalar_select %p243, %s23, 1
          %s245 = smul.addr %s244, 4
          %s246 = smul.addr %s245, 8
          %s247 = scalar_lea.vmem %s1, %s246
        $region36: #{tpu_custom_call.1} parent=27 // pred_fallthru
          _
        // Predicated region
        $region37: #{tpu_custom_call.1} parent=27 // pred_check
          %p248 = pneg %p104
        $region38: #{tpu_custom_call.1} parent=27 // pred_check_branch
          %250 = sbr.rel (%p248) target = $region40
        $region39: #{tpu_custom_call.1} parent=27 // pred_region
          %p251 = scmp.lt.s32.totalorder %s23, 1
          %s252 = scalar_select %p251, %s23, 1
          %p253 = scmp.lt.s32.totalorder %s24, 0
          %s254 = scalar_select %p253, %s24, 0
          %s255 = sadd.s32 %s254, %s252
          %s256 = scalar_lea.vmem %s2, %s255
        $region40: #{tpu_custom_call.1} parent=27 // pred_fallthru
          _
      $region28: #{tpu_custom_call.1} parent=5 // pred_fallthru
        _
      %p257 = scmp.le.s32.totalorder 1, %s16
      %p258 = scmp.lt.s32.totalorder %s16, 3
      %p259 = pnand %p257, %p258
      %p260 = pneg %p259
      // Predicated region
      $region41: #{tpu_custom_call.1} parent=5 // pred_check
        _
      $region42: #{tpu_custom_call.1} parent=5 // pred_check_branch
        %262 = sbr.rel (%p259) target = $region44
      $region43: #{tpu_custom_call.1} parent=5 // pred_region
        %s263 = ssub.s32 %s16, 1
        %p264 = scmp.lt.s32.totalorder %s25, 1
        %s265 = scalar_select %p264, %s25, 1
        %p266 = scmp.lt.s32.totalorder %s26, 0
        %s267 = scalar_select %p266, %s26, 0
        %s268 = smul.addr %s265, 4
        %s269 = sadd.s32 %s267, %s268
        %s270 = smul.addr %s269, 8
        %s271 = scalar_lea.vmem %s0, %s270
        %p272 = pneg %p56
        %p273 = pneg %p53
        %p274 = scmp.lt.s32.totalorder %s25, 1
        %s275 = scalar_select %p274, %s25, 1
        %s276 = smul.addr %s275, 4
        %s277 = smul.addr %s276, 8
        %s278 = scalar_lea.vmem %s1, %s277
        %p279 = pneg %p82
        %p280 = pneg %p79
        %p281 = scmp.lt.s32.totalorder %s25, 1
        %s282 = scalar_select %p281, %s25, 1
        %p283 = scmp.lt.s32.totalorder %s26, 0
        %s284 = scalar_select %p283, %s26, 0
        %s285 = sadd.s32 %s284, %s282
        %s286 = scalar_lea.vmem %s2, %s285
        %p287 = pneg %p110
        %p288 = pneg %p107
        %p289 = pneg %p131
        %p290 = pneg %p128
        %p291 = pneg %p152
        %p292 = pneg %p149
        %p293 = pneg %p173
        %p294 = pneg %p170
        %p295 = pneg %p201
        %p296 = pneg %p198
        %s297 = sand.u32 %s188, 1
        %s298 = scalar_lea.sflag [#allocation4], %s297
        %s299 = sand.u32 %s188, 1
        %s300 = scalar_lea.vmem [#allocation3], %s299
        %p301 = scmp.lt.s32.totalorder %s25, 1
        %s302 = scalar_select %p301, %s25, 1
        %p303 = scmp.lt.s32.totalorder %s26, 0
        %s304 = scalar_select %p303, %s26, 0
        %s305 = smul.addr %s302, 4
        %s306 = sadd.s32 %s304, %s305
        %s307 = smul.addr %s306, 8
        %s308 = scalar_lea.vmem %s0, %s307
        %p309 = scmp.lt.s32.totalorder %s25, 1
        %s310 = scalar_select %p309, %s25, 1
        %s311 = smul.addr %s310, 4
        %s312 = smul.addr %s311, 8
        %s313 = scalar_lea.vmem %s1, %s312
        %p314 = scmp.lt.s32.totalorder %s25, 1
        %s315 = scalar_select %p314, %s25, 1
        %p316 = scmp.lt.s32.totalorder %s26, 0
        %s317 = scalar_select %p316, %s26, 0
        %s318 = sadd.s32 %s317, %s315
        %s319 = scalar_lea.vmem %s2, %s318
        %v320 = vld [vmem:[%s3] sm:$0xff]
        %v321 = vld [vmem:[%s3 + $0x8] sm:$0xff]
        %v322 = vld [vmem:[%s3 + $0x10] sm:$0xff]
        %v323 = vld [vmem:[%s3 + $0x18] sm:$0xff]
        %v324 = vld [vmem:[%s308] sm:$0xff]
        %v325 = vld [vmem:[%s308 + $0x8] sm:$0xff]
        %v326 = vld [vmem:[%s308 + $0x10] sm:$0xff]
        %v327 = vld [vmem:[%s308 + $0x18] sm:$0xff]
        %v328 = vld [vmem:[%s313] sm:$0xff]
        %v329 = vld [vmem:[%s313 + $0x8] sm:$0xff]
        %v330 = vld [vmem:[%s313 + $0x10] sm:$0xff]
        %v331 = vld [vmem:[%s313 + $0x18] sm:$0xff]
        %333 = vset.pattern.permute.xlu0 0
        %334 = vperm.xlu0 %333, %v328
        %v335 = vpop.permute.xlu0 %334
        %338 = vset.pattern.permute.xlu0 0
        %339 = vperm.xlu0 %338, %v329
        %v340 = vpop.permute.xlu0 %339
        %343 = vset.pattern.permute.xlu0 0
        %344 = vperm.xlu0 %343, %v330
        %v345 = vpop.permute.xlu0 %344
        %348 = vset.pattern.permute.xlu0 0
        %349 = vperm.xlu0 %348, %v331
        %v350 = vpop.permute.xlu0 %349
        %vm352 = vcmask 261120
        %v354 = vsel %vm352, %v320, 0
        %v357 = vsel %vm352, %v321, 0
        %v360 = vsel %vm352, %v322, 0
        %v363 = vsel %vm352, %v323, 0
        %365 = vmatprep.subr.mxu0 0.0
        %366 = vmatpush1.msra.mxu0 0.0
        %367 = vmatprep.subr.mxu0 0.0
        %368 = vmatpush1.msra.mxu0 0.0
        %369 = vmatprep.subr.mxu0 0.0
        %370 = vmatpush1.msra.mxu0 0.0
        %371 = vmatprep.subr.mxu0 0.0
        %372 = vmatpush1.msra.mxu0 0.0
        %373 = vmatprep.subr.mxu0 0.0
        %374 = vmatpush1.msra.mxu0 0.0
        %375 = vmatprep.subr.mxu0 0.0
        %376 = vmatpush1.msra.mxu0 0.0
        %377 = vmatprep.subr.mxu0 0.0
        %378 = vmatpush1.msra.mxu0 0.0
        %379 = vmatprep.subr.mxu0 0.0
        %380 = vmatpush1.msra.mxu0 0.0
        %381 = vmatprep.subr.mxu0 0.0
        %382 = vmatpush1.msra.mxu0 0.0
        %383 = vmatprep.subr.mxu0 0.0
        %384 = vmatpush1.msra.mxu0 0.0
        %385 = vmatprep.subr.mxu0 0.0
        %386 = vmatpush1.msra.mxu0 0.0
        %387 = vmatprep.subr.mxu0 0.0
        %388 = vmatpush1.msra.mxu0 0.0
        %389 = vmatprep.subr.mxu0 0.0
        %390 = vmatpush1.msra.mxu0 %v327
        %391 = vmatprep.subr.mxu0 0.0
        %392 = vmatpush1.msra.mxu0 %v326
        %393 = vmatprep.subr.mxu0 0.0
        %394 = vmatpush1.msra.mxu0 %v325
        %395 = vmatprep.subr.mxu0 0.0
        %396 = vmatpush1.msra.mxu0 %v324
        %397 = vmatprep.subr.mxu0 0.0
        %398 = vmatpush2.msra.mxu0 0.0
        %399 = vmatprep.subr.mxu0 0.0
        %400 = vmatpush2.msra.mxu0 0.0
        %401 = vmatprep.subr.mxu0 0.0
        %402 = vmatpush2.msra.mxu0 0.0
        %403 = vmatprep.subr.mxu0 0.0
        %404 = vmatpush2.msra.mxu0 0.0
        %405 = vmatprep.subr.mxu0 0.0
        %406 = vmatpush2.msra.mxu0 0.0
        %407 = vmatprep.subr.mxu0 0.0
        %408 = vmatpush2.msra.mxu0 0.0
        %409 = vmatprep.subr.mxu0 0.0
        %410 = vmatpush2.msra.mxu0 0.0
        %411 = vmatprep.subr.mxu0 0.0
        %412 = vmatpush2.msra.mxu0 0.0
        %413 = vmatprep.subr.mxu0 0.0
        %414 = vmatpush2.msra.mxu0 0.0
        %415 = vmatprep.subr.mxu0 0.0
        %416 = vmatpush2.msra.mxu0 0.0
        %417 = vmatprep.subr.mxu0 0.0
        %418 = vmatpush2.msra.mxu0 0.0
        %419 = vmatprep.subr.mxu0 0.0
        %420 = vmatpush2.msra.mxu0 0.0
        %421 = vmatprep.subr.mxu0 0.0
        %422 = vmatpush2.msra.mxu0 0.0
        %423 = vmatprep.subr.mxu0 0.0
        %424 = vmatpush2.msra.mxu0 0.0
        %425 = vmatprep.subr.mxu0 0.0
        %426 = vmatpush2.msra.mxu0 0.0
        %427 = vmatprep.subr.mxu0 0.0
        %428 = vmatpush2.msra.mxu0 0.0
        %429 = vmatprep.mubr.f32.mxu0 0.0
        %430 = vmatmul.mubr.f32.gmra.mxu0 %v354
        %v431 = vpop.f32.mrf.mxu0
        %v432 = vadd.f32 %v335, %v431
        %v433 = vpop.f32.mrf.mxu0
        %434 = vmatprep.mubr.f32.mxu0 0.0
        %435 = vmatmul.mubr.f32.gmra.mxu0 %v357
        %v436 = vpop.f32.mrf.mxu0
        %v437 = vadd.f32 %v340, %v436
        %v438 = vpop.f32.mrf.mxu0
        %439 = vmatprep.mubr.f32.mxu0 0.0
        %440 = vmatmul.mubr.f32.gmra.mxu0 %v360
        %v441 = vpop.f32.mrf.mxu0
        %v442 = vadd.f32 %v345, %v441
        %v443 = vpop.f32.mrf.mxu0
        %444 = vmatprep.mubr.f32.mxu0 0.0
        %445 = vmatmul.mubr.f32.gmra.mxu0 %v363
        %v446 = vpop.f32.mrf.mxu0
        %v447 = vadd.f32 %v350, %v446
        %v448 = vpop.f32.mrf.mxu0
        %449 = vdwg.mxu0
        %v450 = vtanh.pop %v432
        %v451 = vtanh.pop %v437
        %v452 = vtanh.pop %v442
        %v453 = vtanh.pop %v447
        %v454 = vld [vmem:[%s4] sm:$0xff]
        %v455 = vld [vmem:[%s4 + $0x8] sm:$0xff]
        %v456 = vld [vmem:[%s4 + $0x10] sm:$0xff]
        %v457 = vld [vmem:[%s4 + $0x18] sm:$0xff]
        %459 = vset.pattern.permute.xlu0 0
        %460 = vperm.xlu0 %459, %v454
        %v461 = vpop.permute.xlu0 %460
        %464 = vset.pattern.permute.xlu0 0
        %465 = vperm.xlu0 %464, %v455
        %v466 = vpop.permute.xlu0 %465
        %469 = vset.pattern.permute.xlu0 0
        %470 = vperm.xlu0 %469, %v456
        %v471 = vpop.permute.xlu0 %470
        %474 = vset.pattern.permute.xlu0 0
        %475 = vperm.xlu0 %474, %v457
        %v476 = vpop.permute.xlu0 %475
        %v478 = vmul.f32 %v450, %v461
        %v479 = vmul.f32 %v451, %v466
        %v480 = vmul.f32 %v452, %v471
        %v481 = vmul.f32 %v453, %v476
        %v482 = vadd.f32 %v478, %v479
        %v483 = vadd.f32 %v482, %v480
        %v484 = vadd.f32 %v483, %v481
        %v485 = vrot.slane %v484, 4
        %v486 = vadd.f32 %v484, %v485
        %v487 = vrot.slane %v486, 2
        %v488 = vadd.f32 %v486, %v487
        %v489 = vrot.slane %v488, 1
        %v490 = vadd.f32 %v488, %v489
        %s491 = sld [smem:[#allocation2]]
        %v492 = vstv %s491
        %v493 = vadd.f32 %v490, %v492
        %v494 = vld [vmem:[%s319] sm:$0x1]
        %vm495 = vcmp.ne.s32.totalorder %v494, 0
        %v496 = vsel %vm495, %v493, -inf
        %497 = vst [vmem:[%s300] sm:$0x1] %v496
        %s498 = sand.u32 %s188, 1
        %s499 = scalar_lea.sflag [#allocation4], %s498
        %s500 = sand.u32 %s188, 1
        %s501 = scalar_lea.vmem [#allocation3], %s500
        // Predicated region
        $region45: #{tpu_custom_call.1} parent=43 // pred_check
          %p502 = pneg %p198
        $region46: #{tpu_custom_call.1} parent=43 // pred_check_branch
          %504 = sbr.rel (%p502) target = $region48
        $region47: #{tpu_custom_call.1} parent=43 // pred_region
          %s506 = ssub.s32 16, 16
          %507 = vsyncadd %s499, %s506
          %s508 = sadd.s32 %s26, %s25
          %s509 = smul.addr %s508, 16
          %s510 = scalar_lea.hbm %s6, %s509
          %s512 = sshll.u32 %s501, 4
          %s513 = int_to_ptr.vmem [resolvable:$true] %s512
          %515 = dma.vmem_to_hbm [thread:$0]  %s513, 16, %s510, %s499
        $region48: #{tpu_custom_call.1} parent=43 // pred_fallthru
          _
      $region44: #{tpu_custom_call.1} parent=5 // pred_fallthru
        _
      %p516 = scmp.le.s32.totalorder 2, %s16
      // Predicated region
      $region49: #{tpu_custom_call.1} parent=5 // pred_check
        %p517 = pneg %p516
      $region50: #{tpu_custom_call.1} parent=5 // pred_check_branch
        %519 = sbr.rel (%p517) target = $region52
      $region51: #{tpu_custom_call.1} parent=5 // pred_region
        %s520 = ssub.s32 %s16, 2
        // Predicated region
        $region53: #{tpu_custom_call.1} parent=51 // pred_check
          %p521 = pneg %p204
        $region54: #{tpu_custom_call.1} parent=51 // pred_check_branch
          %523 = sbr.rel (%p521) target = $region56
        $region55: #{tpu_custom_call.1} parent=51 // pred_region
          %s524 = sand.u32 %s189, 1
          %s525 = scalar_lea.sflag [#allocation4], %s524
          %s526 = sand.u32 %s189, 1
          %s527 = scalar_lea.vmem [#allocation3], %s526
          %528 = dma.done %s525, 16
        $region56: #{tpu_custom_call.1} parent=51 // pred_fallthru
          _
      $region52: #{tpu_custom_call.1} parent=5 // pred_fallthru
        _
    $region6: #{tpu_custom_call.1} parent=1 // loop_footer
      %s20 = sadd.s32 1, %s16
    $region7: #{tpu_custom_call.1} parent=1 // loop_footer_branch
      %15 = sbr.rel target = $region3
    $region8: #{tpu_custom_call.1} parent=1 // loop_exit
      _
    %529 = vsyncpa [#allocation4], 1
    %s530 = scalar_lea.sflag [#allocation4], 1
    %531 = vsyncpa %s530, 1

</llo_original>
